<compile_context>
chip_gen: v7x
topology: tpu7x:2x2x1
jax: 0.10.0
libtpu: 0.0.40
codegen_flags: <defaults>
</compile_context>

<pallas_src>
import functools

import jax
import jax.numpy as jnp
from jax.experimental import pallas as pl
from jax.experimental.pallas import tpu as pltpu


# --------------------------------------------------------------------------- #
# Kernel 1: normalize features + positive-pair logsumexp (small, grid-less).
# --------------------------------------------------------------------------- #
def _prep_kernel(feats_ref, fhat_ref, pos_ref, *, tau):
    f = feats_ref[...].astype(jnp.float32)              # (M, n_tokens, D_pad)
    n_modalities = f.shape[0]

    inv_norm = jax.lax.rsqrt(
        jnp.maximum(jnp.sum(f * f, axis=2, keepdims=True), jnp.float32(1e-16)))
    f_hat = f * inv_norm                                 # unit-norm rows
    fhat_ref[...] = f_hat

    inv_tau = jnp.float32(1.0 / tau)
    total = jnp.zeros((1, 1), jnp.float32)
    # positives for row (k, i) are <f_hat[k, i], f_hat[j, i]> for j != k;
    # they are never block-diagonal-masked, so compute them directly.
    for k in range(n_modalities):
        cols = []
        for j in range(n_modalities):
            if j == k:
                continue
            cols.append(jnp.sum(f_hat[k] * f_hat[j], axis=1, keepdims=True))
        pos = cols[0] if len(cols) == 1 else jnp.concatenate(cols, axis=1)
        z = pos * inv_tau                                # (n_tokens, M-1)
        mp = jnp.max(z, axis=1, keepdims=True)
        lse = jnp.log(jnp.sum(jnp.exp(z - mp), axis=1, keepdims=True)) + mp
        total = total + jnp.sum(lse, keepdims=True)
    pos_ref[...] = total


# --------------------------------------------------------------------------- #
# Kernel 2: tiled cosine-sim gram matrix + online per-row logsumexp.
# --------------------------------------------------------------------------- #
def _gram_lse_kernel(frow_ref, fcol_ref, logits_ref, rowlse_ref, m_ref, l_ref,
                     *, n_patches, n_valid, tau):
    i = pl.program_id(0)                                 # row-tile index (parallel)
    j = pl.program_id(1)                                 # col-tile index (reduction)
    TM, TN = logits_ref.shape
    inv_tau = jnp.float32(1.0 / tau)
    NEG_BIG = jnp.float32(-1e30)                         # finite "-inf" (NaN-safe)

    @pl.when(j == 0)
    def _():
        m_ref[...] = jnp.full(m_ref.shape, NEG_BIG, jnp.float32)
        l_ref[...] = jnp.zeros(l_ref.shape, jnp.float32)

    # features are pre-normalized -> this IS the cosine similarity tile.
    s = jax.lax.dot_general(frow_ref[...], fcol_ref[...],
                            (((1,), (1,)), ((), ())),
                            preferred_element_type=jnp.float32)   # (TM, TN)

    def online_update(z):
        m_prev = m_ref[...]
        m_new = jnp.maximum(m_prev, jnp.max(z, axis=1, keepdims=True))
        l_ref[...] = (l_ref[...] * jnp.exp(m_prev - m_new)
                      + jnp.sum(jnp.exp(z - m_new), axis=1, keepdims=True))
        m_ref[...] = m_new

    # Does this tile need any masking (block-diagonal overlap or padded cols)?
    row_blk_lo = (i * TM) // n_patches
    row_blk_hi = (i * TM + TM - 1) // n_patches
    col_blk_lo = (j * TN) // n_patches
    col_blk_hi = (j * TN + TN - 1) // n_patches
    overlaps = jnp.logical_and(row_blk_lo <= col_blk_hi, col_blk_lo <= row_blk_hi)
    has_pad = (j * TN + TN) > n_valid
    needs_mask = jnp.logical_or(overlaps, has_pad)

    @pl.when(needs_mask)
    def _():
        row_blk = ((i * TM + jax.lax.broadcasted_iota(jnp.int32, (TM, 1), 0))
                   // n_patches)
        col_idx = j * TN + jax.lax.broadcasted_iota(jnp.int32, (1, TN), 1)
        col_blk = col_idx // n_patches
        diag = row_blk == col_blk                        # same n_patches block
        invalid = jnp.logical_or(diag, col_idx >= n_valid)
        logits_ref[...] = jnp.where(diag, -jnp.inf, s)
        online_update(jnp.where(invalid, NEG_BIG, s * inv_tau))

    @pl.when(jnp.logical_not(needs_mask))
    def _():
        logits_ref[...] = s
        online_update(s * inv_tau)

    @pl.when(j == pl.num_programs(1) - 1)
    def _():
        rowlse_ref[...] = m_ref[...] + jnp.log(l_ref[...])


# --------------------------------------------------------------------------- #
# Wrapper
# --------------------------------------------------------------------------- #
def _round_up(x, m):
    return ((x + m - 1) // m) * m


def milnce_forward(x, y=None, tau=0.1):
    """Pallas implementation of MILNCE.forward (no-mask path)."""
    modalities = [k.split('_')[1] for k in list(x.keys()) if k.startswith('tokens')]
    feats = [x[f'tokens_{m}'] for m in modalities]
    B, P, D = feats[0].shape
    M = len(modalities)
    n_tokens = B * P
    N = M * n_tokens

    # lane-dense feature layout (pad D to a multiple of 128 with zeros).
    D_pad = _round_up(D, 128)
    feats3 = jnp.stack([f.reshape(n_tokens, D) for f in feats],
                       axis=0).astype(jnp.float32)       # (M, n_tokens, D)
    if D_pad != D:
        feats3 = jnp.pad(feats3, ((0, 0), (0, 0), (0, D_pad - D)))

    # --- kernel 1: normalization + positives --------------------------------
    f_hat, pos_loss = pl.pallas_call(
        functools.partial(_prep_kernel, tau=float(tau)),
        out_shape=(jax.ShapeDtypeStruct((M, n_tokens, D_pad), jnp.float32),
                   jax.ShapeDtypeStruct((1, 1), jnp.float32)),
        in_specs=[pl.BlockSpec(memory_space=pltpu.MemorySpace.VMEM)],
        out_specs=(pl.BlockSpec(memory_space=pltpu.MemorySpace.VMEM),
                   pl.BlockSpec(memory_space=pltpu.MemorySpace.VMEM)),
    )(feats3)

    # --- kernel 2: tiled gram matrix + online row logsumexp ------------------
    if N <= 512:
        TM = TN = _round_up(N, 128)                      # small problems: 1 tile
    else:
        TM, TN = 256, 512                                # ~2.5 MiB live VMEM
    N_pad = _round_up(N, max(TM, TN))

    f_flat = f_hat.reshape(N, D_pad)
    if N_pad != N:
        f_flat = jnp.pad(f_flat, ((0, N_pad - N), (0, 0)))

    grid = (N_pad // TM, N_pad // TN)
    kernel = functools.partial(_gram_lse_kernel,
                               n_patches=P, n_valid=N, tau=float(tau))
    logits_pad, row_lse = pl.pallas_call(
        kernel,
        out_shape=(jax.ShapeDtypeStruct((N_pad, N_pad), jnp.float32),
                   jax.ShapeDtypeStruct((N_pad, 1), jnp.float32)),
        grid_spec=pltpu.PrefetchScalarGridSpec(
            num_scalar_prefetch=0,
            grid=grid,
            in_specs=[pl.BlockSpec((TM, D_pad), lambda i, j: (i, 0)),
                      pl.BlockSpec((TN, D_pad), lambda i, j: (j, 0))],
            out_specs=(pl.BlockSpec((TM, TN), lambda i, j: (i, j)),
                       pl.BlockSpec((TM, 1), lambda i, j: (i, 0))),
            scratch_shapes=[
                pltpu.VMEM((TM, 1), jnp.float32),   # running max
                pltpu.VMEM((TM, 1), jnp.float32),   # running sum
            ],
        ),
        compiler_params=pltpu.CompilerParams(
            dimension_semantics=("parallel", "arbitrary")),
    )(f_flat, f_flat)

    logits = logits_pad[:N, :N]
    loss = (jnp.sum(row_lse[:N, 0]) - pos_loss[0, 0]) / jnp.float32(N)
    return {'contrastive_loss': loss, 'logits': logits}


# --------------------------------------------------------------------------- #
# Pure-JAX reference (mirror of the PyTorch forward, no masks) for verification
# --------------------------------------------------------------------------- #
def _reference_milnce(x, tau=0.1):
    modalities = [k.split('_')[1] for k in x.keys() if k.startswith('tokens')]
    feats = [x[f'tokens_{m}'] for m in modalities]
    B, P, D = feats[0].shape
    features = jnp.concatenate(feats, axis=0).reshape(-1, D).astype(jnp.float32)
    N = features.shape[0]
    M = len(modalities)
    n_tokens = B * P

    w = jnp.linalg.norm(features, axis=1, keepdims=True)
    logits = (features @ features.T) / jnp.maximum(w @ w.T, 1e-8)
    blk_r = jnp.arange(N)[:, None] // P
    blk_c = jnp.arange(N)[None, :] // P
    logits = jnp.where(blk_r == blk_c, -jnp.inf, logits)

    loss = jnp.sum(jax.scipy.special.logsumexp(logits / tau, axis=1))
    idx = jnp.array([[i + j * n_tokens for j in range(M) if j != k]
                     for k in range(M) for i in range(n_tokens)], dtype=jnp.int32)
    pos = jnp.take_along_axis(logits, idx, axis=1)
    loss = loss - jnp.sum(jax.scipy.special.logsumexp(pos / tau, axis=1))
    return {'contrastive_loss': loss / N, 'logits': logits}


if __name__ == "__main__":
    key = jax.random.PRNGKey(0)
    k1, k2 = jax.random.split(key)

    B, P, D = 2, 8, 32  # batch, patches per sample, feature dim
    x = {
        'tokens_s2': jax.random.normal(k1, (B, P, D), dtype=jnp.float32),
        'tokens_aerial': jax.random.normal(k2, (B, P, D), dtype=jnp.float32),
    }

    out = milnce_forward(x, y=None, tau=0.1)
    jax.block_until_ready(out['contrastive_loss'])
    jax.block_until_ready(out['logits'])

    ref = _reference_milnce(x, tau=0.1)
    assert jnp.allclose(out['logits'], ref['logits'], rtol=1e-4, atol=1e-4)
    assert jnp.allclose(out['contrastive_loss'], ref['contrastive_loss'],
                        rtol=1e-4, atol=1e-4)

    print("KERNEL_OK")
</pallas_src>

<mosaic_0001>
module attributes {stable_mosaic.version = 11 : i64} {
  func.func @_prep_kernel(%arg0: memref<2x16x128xf32, #tpu.memory_space<vmem>>, %arg1: memref<2x16x128xf32, #tpu.memory_space<vmem>>, %arg2: memref<1x1xf32, #tpu.memory_space<vmem>>) attributes {dimension_semantics = [], scalar_prefetch = 0 : i64, scratch_operands = 0 : i64, tpu.core_type = #tpu.core_type<tc>} {
    %c0 = arith.constant 0 : index
    %c0_0 = arith.constant 0 : index
    %c0_1 = arith.constant 0 : index
    %0 = vector.load %arg0[%c0, %c0_0, %c0_1] : memref<2x16x128xf32, #tpu.memory_space<vmem>>, vector<2x16x128xf32>
    %1 = arith.mulf %0, %0 : vector<2x16x128xf32>
    %cst = arith.constant dense<0.000000e+00> : vector<2x16xf32>
    %2 = vector.multi_reduction <add>, %1, %cst [2] : vector<2x16x128xf32> to vector<2x16xf32>
    %3 = vector.shape_cast %2 : vector<2x16xf32> to vector<2x16x1xf32>
    %cst_2 = arith.constant 1.000000e-16 : f32
    %4 = vector.broadcast %cst_2 : f32 to vector<2x16x1xf32>
    %5 = arith.maximumf %3, %4 : vector<2x16x1xf32>
    %6 = math.rsqrt %5 : vector<2x16x1xf32>
    %7 = vector.broadcast %6 : vector<2x16x1xf32> to vector<2x16x128xf32>
    %8 = arith.mulf %0, %7 : vector<2x16x128xf32>
    %c0_3 = arith.constant 0 : index
    %c0_4 = arith.constant 0 : index
    %c0_5 = arith.constant 0 : index
    %9 = vector.load %arg1[%c0_3, %c0_4, %c0_5] : memref<2x16x128xf32, #tpu.memory_space<vmem>>, vector<2x16x128xf32>
    tpu.vector_store %arg1[%c0_3, %c0_4, %c0_5], %8 {strides = array<i32>} : memref<2x16x128xf32, #tpu.memory_space<vmem>>, vector<2x16x128xf32>,
    %cst_6 = arith.constant 0.000000e+00 : f32
    %10 = vector.broadcast %cst_6 : f32 to vector<1x1xf32>
    %11 = vector.extract_strided_slice %8 {offsets = [0, 0, 0], sizes = [1, 16, 128], strides = [1, 1, 1]} : vector<2x16x128xf32> to vector<1x16x128xf32>
    %12 = vector.shape_cast %11 : vector<1x16x128xf32> to vector<16x128xf32>
    %13 = vector.extract_strided_slice %8 {offsets = [1, 0, 0], sizes = [1, 16, 128], strides = [1, 1, 1]} : vector<2x16x128xf32> to vector<1x16x128xf32>
    %14 = vector.shape_cast %13 : vector<1x16x128xf32> to vector<16x128xf32>
    %15 = arith.mulf %12, %14 : vector<16x128xf32>
    %cst_7 = arith.constant dense<0.000000e+00> : vector<16xf32>
    %16 = vector.multi_reduction <add>, %15, %cst_7 [1] : vector<16x128xf32> to vector<16xf32>
    %17 = vector.shape_cast %16 : vector<16xf32> to vector<16x1xf32>
    %cst_8 = arith.constant 1.000000e+01 : f32
    %18 = vector.broadcast %cst_8 : f32 to vector<16x1xf32>
    %19 = arith.mulf %17, %18 : vector<16x1xf32>
    %cst_9 = arith.constant dense<0xFF800000> : vector<16xf32>
    %20 = vector.multi_reduction <maximumf>, %19, %cst_9 [1] : vector<16x1xf32> to vector<16xf32>
    %21 = vector.shape_cast %20 : vector<16xf32> to vector<16x1xf32>
    %22 = arith.subf %19, %21 : vector<16x1xf32>
    %23 = math.exp %22 : vector<16x1xf32>
    %cst_10 = arith.constant dense<0.000000e+00> : vector<16xf32>
    %24 = vector.multi_reduction <add>, %23, %cst_10 [1] : vector<16x1xf32> to vector<16xf32>
    %25 = vector.shape_cast %24 : vector<16xf32> to vector<16x1xf32>
    %26 = math.log %25 : vector<16x1xf32>
    %27 = arith.addf %26, %21 : vector<16x1xf32>
    %28 = vector.shape_cast %27 : vector<16x1xf32> to vector<1x16x1xf32>
    %cst_11 = arith.constant dense<0.000000e+00> : vector<1xf32>
    %29 = vector.multi_reduction <add>, %28, %cst_11 [1, 2] : vector<1x16x1xf32> to vector<1xf32>
    %30 = vector.shape_cast %29 : vector<1xf32> to vector<1x1x1xf32>
    %31 = vector.extract %30[0, 0, 0] : f32 from vector<1x1x1xf32>
    %32 = vector.broadcast %31 : f32 to vector<1x1xf32>
    %33 = arith.addf %10, %32 : vector<1x1xf32>
    %34 = vector.extract_strided_slice %8 {offsets = [1, 0, 0], sizes = [1, 16, 128], strides = [1, 1, 1]} : vector<2x16x128xf32> to vector<1x16x128xf32>
    %35 = vector.shape_cast %34 : vector<1x16x128xf32> to vector<16x128xf32>
    %36 = vector.extract_strided_slice %8 {offsets = [0, 0, 0], sizes = [1, 16, 128], strides = [1, 1, 1]} : vector<2x16x128xf32> to vector<1x16x128xf32>
    %37 = vector.shape_cast %36 : vector<1x16x128xf32> to vector<16x128xf32>
    %38 = arith.mulf %35, %37 : vector<16x128xf32>
    %cst_12 = arith.constant dense<0.000000e+00> : vector<16xf32>
    %39 = vector.multi_reduction <add>, %38, %cst_12 [1] : vector<16x128xf32> to vector<16xf32>
    %40 = vector.shape_cast %39 : vector<16xf32> to vector<16x1xf32>
    %cst_13 = arith.constant 1.000000e+01 : f32
    %41 = vector.broadcast %cst_13 : f32 to vector<16x1xf32>
    %42 = arith.mulf %40, %41 : vector<16x1xf32>
    %cst_14 = arith.constant dense<0xFF800000> : vector<16xf32>
    %43 = vector.multi_reduction <maximumf>, %42, %cst_14 [1] : vector<16x1xf32> to vector<16xf32>
    %44 = vector.shape_cast %43 : vector<16xf32> to vector<16x1xf32>
    %45 = arith.subf %42, %44 : vector<16x1xf32>
    %46 = math.exp %45 : vector<16x1xf32>
    %cst_15 = arith.constant dense<0.000000e+00> : vector<16xf32>
    %47 = vector.multi_reduction <add>, %46, %cst_15 [1] : vector<16x1xf32> to vector<16xf32>
    %48 = vector.shape_cast %47 : vector<16xf32> to vector<16x1xf32>
    %49 = math.log %48 : vector<16x1xf32>
    %50 = arith.addf %49, %44 : vector<16x1xf32>
    %51 = vector.shape_cast %50 : vector<16x1xf32> to vector<1x16x1xf32>
    %cst_16 = arith.constant dense<0.000000e+00> : vector<1xf32>
    %52 = vector.multi_reduction <add>, %51, %cst_16 [1, 2] : vector<1x16x1xf32> to vector<1xf32>
    %53 = vector.shape_cast %52 : vector<1xf32> to vector<1x1x1xf32>
    %54 = vector.extract %53[0, 0, 0] : f32 from vector<1x1x1xf32>
    %55 = vector.broadcast %54 : f32 to vector<1x1xf32>
    %56 = arith.addf %33, %55 : vector<1x1xf32>
    %c0_17 = arith.constant 0 : index
    %c0_18 = arith.constant 0 : index
    %57 = vector.load %arg2[%c0_17, %c0_18] : memref<1x1xf32, #tpu.memory_space<vmem>>, vector<1x1xf32>
    tpu.vector_store %arg2[%c0_17, %c0_18], %56 {strides = array<i32>} : memref<1x1xf32, #tpu.memory_space<vmem>>, vector<1x1xf32>,
    return
  }
}

</mosaic_0001>

<llo_original>
// kernel: tpu_custom_call.1
$region0: #{tpu_custom_call.1}
  #allocation0 [shape = 'u32[]', space=smem, size = 0x4, offset = 0x4, fixed_abs, tag = 'smem constant byte address 0x4 - core index']
  #allocation1 [shape = 'u32[144,128]{1,0:T(1,128)}', space=vmem, size = 0x12000, scoped, tag = 'internal scratch']
  %s0 = inlined_call_operand.hbm [shape: f32[2,16,128], index: 0, kind: input, shape index: {}]
  %s1 = inlined_call_operand.hbm [shape: f32[2,16,128], index: 1, kind: output, shape index: {0}]
  %s2 = inlined_call_operand.hbm [shape: f32[1,1], index: 2, kind: output, shape index: {1}]
  %3 = xla_tuple %s1, %s2
  %s4 = sld [smem:[#allocation0]]
  $region26: #{tpu_custom_call.1} parent=0
    _
  %s6 = ssub.s32 1, %s4
  %s7 = scalar_select 0, %s6, %s4
  $region1: #{tpu_custom_call.1} parent=0
    #allocation2 [shape = 'u8[16384]{0}', space=vmem, size = 0x4000, scoped, tag = 'input window, operand 0, single buffered']
    #allocation3 [shape = 's32[1]{0}', space=sflag, size = 0x4, scoped, tag = 'scoped memory for tpu_custom_call.1']
    #allocation4 [shape = 's32[1]{0}', space=sflag, size = 0x4, scoped, tag = 'scoped memory for tpu_custom_call.1']
    #allocation5 [shape = 'u8[16384]{0}', space=vmem, size = 0x4000, scoped, tag = 'output window, operand 0, single buffered']
    #allocation6 [shape = 'u8[512]{0}', space=vmem, size = 0x400, scoped, tag = 'output window, operand 1, single buffered']
    #allocation7 [shape = 's32[1]{0}', space=sflag, size = 0x4, scoped, tag = 'scoped memory for tpu_custom_call.1']
    %8 = vsyncpa [#allocation3], 0
    %9 = vsyncpa [#allocation4], 0
    %10 = vsyncpa [#allocation7], 0
    // Predicated region
    $region2: #{tpu_custom_call.1} parent=1 // pred_check
      _
    $region3: #{tpu_custom_call.1} parent=1 // pred_check_branch
      %12 = sbr.rel (0) target = $region5
    $region4: #{tpu_custom_call.1} parent=1 // pred_region
      %s14 = ssub.s32 512, 512
      %15 = vsyncadd [#allocation3], %s14
      %s16 = sshll.u32 [#allocation2], 4
      %s17 = int_to_ptr.vmem [resolvable:$true] %s16
      %22 = dma.hbm_to_vmem [thread:$0]  %s0, 512, %s17, [#allocation3], 128, 128, 8
    $region5: #{tpu_custom_call.1} parent=1 // pred_fallthru
      _
    // Predicated region
    $region6: #{tpu_custom_call.1} parent=1 // pred_check
      _
    $region7: #{tpu_custom_call.1} parent=1 // pred_check_branch
      %24 = sbr.rel (0) target = $region9
    $region8: #{tpu_custom_call.1} parent=1 // pred_region
      %25 = dma.done [#allocation3], 512
    $region9: #{tpu_custom_call.1} parent=1 // pred_fallthru
      _
    %v26 = vld [vmem:[#allocation2] sm:$0xff]
    %v27 = vld [vmem:[#allocation2 + $0x8] sm:$0xff]
    %v28 = vld [vmem:[#allocation2 + $0x10] sm:$0xff]
    %v29 = vld [vmem:[#allocation2 + $0x18] sm:$0xff]
    %v30 = vmul.f32 %v26, %v26
    %v31 = vmul.f32 %v27, %v27
    %v32 = vmul.f32 %v28, %v28
    %v33 = vmul.f32 %v29, %v29
    %34 = vadd.xlane.f32.xlu0 %v30
    %v35 = vpop.xlane.xlu0 %34
    %36 = vadd.xlane.f32.xlu0 %v31
    %v37 = vpop.xlane.xlu0 %36
    %38 = vadd.xlane.f32.xlu0 %v32
    %v39 = vpop.xlane.xlu0 %38
    %40 = vadd.xlane.f32.xlu0 %v33
    %v41 = vpop.xlane.xlu0 %40
    %v42 = vmax.f32 %v35, 1e-16
    %v43 = vmax.f32 %v37, 1e-16
    %v44 = vmax.f32 %v39, 1e-16
    %v45 = vmax.f32 %v41, 1e-16
    %v46 = vrsqrt.pop %v42
    %v47 = vrsqrt.pop %v43
    %v48 = vrsqrt.pop %v44
    %v49 = vrsqrt.pop %v45
    %v50 = vmul.f32 %v26, %v46
    %v51 = vmul.f32 %v27, %v47
    %v52 = vmul.f32 %v28, %v48
    %v53 = vmul.f32 %v29, %v49
    %54 = vst [vmem:[#allocation5] sm:$0xff] %v50
    %55 = vst [vmem:[#allocation5 + $0x8] sm:$0xff] %v51
    %56 = vst [vmem:[#allocation5 + $0x10] sm:$0xff] %v52
    %57 = vst [vmem:[#allocation5 + $0x18] sm:$0xff] %v53
    %v58 = vmul.f32 %v50, %v52
    %v59 = vmul.f32 %v51, %v53
    %60 = vadd.xlane.f32.xlu0 %v58
    %v61 = vpop.xlane.xlu0 %60
    %62 = vadd.xlane.f32.xlu0 %v59
    %v63 = vpop.xlane.xlu0 %62
    %v64 = vmul.f32 %v61, 10.0
    %v65 = vmul.f32 %v63, 10.0
    %v66 = vsub.f32 %v64, %v64
    %v67 = vsub.f32 %v65, %v65
    %v68 = vmul.f32 %v66, 1.442695
    %v69 = vpow.pop %v68
    %v70 = vmul.f32 %v67, 1.442695
    %v71 = vpow.pop %v70
    %v72 = vadd.f32 %v69, 0.0
    %v73 = vadd.f32 %v71, 0.0
    %v74 = vlog2.pop %v72
    %v75 = vmul.f32 %v74, 0.6931472
    %v76 = vlog2.pop %v73
    %v77 = vmul.f32 %v76, 0.6931472
    %v78 = vadd.f32 %v75, %v64
    %v79 = vadd.f32 %v77, %v65
    %vm80 = vcmask 7168
    %v81 = vsel %vm80, %v78, 0.0
    %v82 = vsel %vm80, %v79, 0.0
    %v83 = vadd.f32 %v81, %v82
    %84 = vadd.xlane.f32.xlu0 %v83
    %v85 = vpop.xlane.xlu0 %84
    %v86 = vrot.slane %v85, 4
    %v87 = vadd.f32 %v85, %v86
    %v88 = vrot.slane %v87, 2
    %v89 = vadd.f32 %v87, %v88
    %v90 = vrot.slane %v89, 1
    %v91 = vadd.f32 %v89, %v90
    %s92 = vtos %v91
    %v93 = vstv %s92
    %v94 = vadd.f32 %v93, 0.0
    %v95 = vadd.f32 %v94, %v93
    %vm96 = vcmask 0
    %97 = vst.msk [vmem:[#allocation6] sm:$0x1] %vm96, %v95
    // Predicated region
    $region10: #{tpu_custom_call.1} parent=1 // pred_check
      _
    $region11: #{tpu_custom_call.1} parent=1 // pred_check_branch
      %99 = sbr.rel (0) target = $region13
    $region12: #{tpu_custom_call.1} parent=1 // pred_region
      %s101 = ssub.s32 512, 512
      %102 = vsyncadd [#allocation4], %s101
      %s103 = sshll.u32 [#allocation5], 4
      %s104 = int_to_ptr.vmem [resolvable:$true] %s103
      %109 = dma.vmem_to_hbm [thread:$0]  %s104, 512, %s1, [#allocation4], 128, 128, 8
    $region13: #{tpu_custom_call.1} parent=1 // pred_fallthru
      _
    // Predicated region
    $region14: #{tpu_custom_call.1} parent=1 // pred_check
      _
    $region15: #{tpu_custom_call.1} parent=1 // pred_check_branch
      %111 = sbr.rel (0) target = $region17
    $region16: #{tpu_custom_call.1} parent=1 // pred_region
      %s113 = ssub.s32 16, 16
      %114 = vsyncadd [#allocation7], %s113
      %s116 = sshll.u32 [#allocation6], 4
      %s117 = int_to_ptr.vmem [resolvable:$true] %s116
      %119 = dma.vmem_to_hbm [thread:$0]  %s117, 16, %s2, [#allocation7]
    $region17: #{tpu_custom_call.1} parent=1 // pred_fallthru
      _
    // Predicated region
    $region18: #{tpu_custom_call.1} parent=1 // pred_check
      _
    $region19: #{tpu_custom_call.1} parent=1 // pred_check_branch
      %121 = sbr.rel (0) target = $region21
    $region20: #{tpu_custom_call.1} parent=1 // pred_region
      %122 = dma.done [#allocation4], 512
    $region21: #{tpu_custom_call.1} parent=1 // pred_fallthru
      _
    // Predicated region
    $region22: #{tpu_custom_call.1} parent=1 // pred_check
      _
    $region23: #{tpu_custom_call.1} parent=1 // pred_check_branch
      %124 = sbr.rel (0) target = $region25
    $region24: #{tpu_custom_call.1} parent=1 // pred_region
      %125 = dma.done [#allocation7], 16
    $region25: #{tpu_custom_call.1} parent=1 // pred_fallthru
      _
    %126 = vsyncpa [#allocation3], 1
    %127 = vsyncpa [#allocation4], 1
    %128 = vsyncpa [#allocation7], 1

</llo_original>
